<compile_context>
chip_gen: v6e
topology: v6e:2x2x1
jax: 0.10.0
libtpu: 0.0.40
codegen_flags: <defaults>
</compile_context>

<pallas_src>
import functools

import jax
import jax.numpy as jnp
from jax.experimental import pallas as pl
from jax.experimental.pallas import tpu as pltpu


def _round_up(x, m):
    return ((x + m - 1) // m) * m


def _head_kernel(x_ref, w_ref, b_ref, y_ref):
    """Linear only (reduction == 'none'): y = x @ W^T + b."""
    y = jnp.dot(x_ref[...], w_ref[...], preferred_element_type=jnp.float32)
    y_ref[...] = (y + b_ref[...]).astype(y_ref.dtype)


def _head_reduce_kernel(x_ref, w_ref, b_ref, y_ref, red_ref, *,
                        batch, tile_m, reduction, denom):
    """Linear + running scalar reduction (sum / mean) across the batch grid."""
    i = pl.program_id(0)

    # MXU matmul: bf16 x / W^T, f32 accumulation; f32 epilogue (bias add).
    y = jnp.dot(x_ref[...], w_ref[...], preferred_element_type=jnp.float32)
    y = y + b_ref[...]
    y_ref[...] = y.astype(y_ref.dtype)

    # Mask rows that are batch padding (zero-padded x rows still pick up the
    # bias, so they must not contribute to the reduction).  Padded out_dim
    # columns carry zero weight & zero bias, so they contribute nothing.
    row = i * tile_m + jax.lax.broadcasted_iota(jnp.int32, y.shape, 0)
    tile_sum = jnp.sum(jnp.where(row < batch, y, 0.0))

    @pl.when(i == 0)
    def _():
        red_ref[0, 0] = jnp.float32(0.0)

    red_ref[0, 0] += tile_sum

    if reduction == "mean":
        @pl.when(i == pl.num_programs(0) - 1)
        def _():
            red_ref[0, 0] = red_ref[0, 0] * jnp.float32(1.0 / denom)


class BentoLossPallas:
    """JAX/Pallas equivalent of BentoLoss's concrete pieces."""

    def __init__(self, in_dim, out_dim, reduction="mean", key=None):
        if key is None:
            key = jax.random.PRNGKey(0)
        kw, kb = jax.random.split(key)
        # nn.Linear init: U(-1/sqrt(in_dim), 1/sqrt(in_dim)) for weight & bias.
        bound = 1.0 / (in_dim ** 0.5)
        # PyTorch weight is [out_dim, in_dim]; store transposed for the kernel.
        self.w_t = jax.random.uniform(
            kw, (in_dim, out_dim), jnp.float32, minval=-bound, maxval=bound)
        self.b = jax.random.uniform(
            kb, (1, out_dim), jnp.float32, minval=-bound, maxval=bound)
        self.in_dim = in_dim
        self.out_dim = out_dim
        self.reduction = reduction

    # Abstract in the reference module.
    def predict(self, *args):
        raise NotImplementedError

    def forward(self, *args):
        raise NotImplementedError

    def loss(self, *args):
        raise NotImplementedError

    def apply_head(self, x, tile_m=None):
        """y = output_head(x); loss = reduce(y).  x: [B, in_dim] f32."""
        B = x.shape[0]
        in_dim, out_dim = self.in_dim, self.out_dim

        # Lane-dense y stores: pad out_dim to a multiple of 128.
        out_dim_p = _round_up(out_dim, 128)

        # Batch tile: multiple of 8 sublanes, capped at 512 rows so that
        # double-buffered x/y tiles fit v7x's smaller VMEM as in_dim grows.
        if tile_m is None:
            tile_m = min(512, _round_up(B, 8))
        tile_m = _round_up(tile_m, 8)
        Bp = _round_up(B, tile_m)
        grid = Bp // tile_m

        # Pad inputs (zero rows / zero weight & bias columns).
        x_p = jnp.pad(x, ((0, Bp - B), (0, 0))) if Bp != B else x
        w_p, b_p = self.w_t, self.b
        if out_dim_p != out_dim:
            w_p = jnp.pad(w_p, ((0, 0), (0, out_dim_p - out_dim)))
            b_p = jnp.pad(b_p, ((0, 0), (0, out_dim_p - out_dim)))

        # bf16 inputs: halve HBM traffic, native MXU dtype; accumulate in f32.
        x_bf = x_p.astype(jnp.bfloat16)
        w_bf = w_p.astype(jnp.bfloat16)

        in_specs = [
            pl.BlockSpec((tile_m, in_dim), lambda i: (i, 0)),      # x tile
            pl.BlockSpec((in_dim, out_dim_p), lambda i: (0, 0)),   # W^T resident
            pl.BlockSpec((1, out_dim_p), lambda i: (0, 0)),        # bias resident
        ]
        y_spec = pl.BlockSpec((tile_m, out_dim_p), lambda i: (i, 0))
        y_shape = jax.ShapeDtypeStruct((Bp, out_dim_p), jnp.float32)

        # VMEM budget: double-buffered x (bf16) + y (f32) tiles, resident W/b.
        vmem_est = (2 * (tile_m * in_dim * 2 + tile_m * out_dim_p * 4)
                    + in_dim * out_dim_p * 2 + out_dim_p * 4)
        vmem_limit = int(min(max(2 * vmem_est, 4 << 20), 48 << 20))

        cost = pl.CostEstimate(
            flops=2 * Bp * in_dim * out_dim_p,
            transcendentals=0,
            bytes_accessed=(x_bf.size * 2 + w_bf.size * 2 + b_p.size * 4
                            + Bp * out_dim_p * 4 + 4),
        )

        if self.reduction == "none":
            y_p = pl.pallas_call(
                _head_kernel,
                out_shape=y_shape,
                grid=(grid,),
                in_specs=in_specs,
                out_specs=y_spec,
                compiler_params=pltpu.CompilerParams(
                    dimension_semantics=("parallel",),
                    vmem_limit_bytes=vmem_limit),
                cost_estimate=cost,
            )(x_bf, w_bf, b_p)
            y = y_p[:B, :out_dim]
            return y, y

        kernel = functools.partial(
            _head_reduce_kernel, batch=B, tile_m=tile_m,
            reduction=self.reduction, denom=float(B * out_dim))
        y_p, red = pl.pallas_call(
            kernel,
            out_shape=(y_shape, jax.ShapeDtypeStruct((1, 1), jnp.float32)),
            grid=(grid,),
            in_specs=in_specs,
            out_specs=(
                y_spec,
                # Scalar reduction lives in SMEM, resident across the grid.
                pl.BlockSpec(memory_space=pltpu.MemorySpace.SMEM),
            ),
            compiler_params=pltpu.CompilerParams(
                # Batch axis carries the running reduction -> "arbitrary".
                dimension_semantics=("arbitrary",),
                vmem_limit_bytes=vmem_limit),
            cost_estimate=cost,
        )(x_bf, w_bf, b_p)
        y = y_p[:B, :out_dim]
        return y, red[0, 0]


if __name__ == "__main__":
    key = jax.random.PRNGKey(0)
    k_x, k_p = jax.random.split(key)

    # Small shapes; B deliberately not a tile multiple to exercise masking,
    # tile_m=8 to exercise the multi-step grid + running reduction.
    B, in_dim, out_dim = 20, 32, 16
    x = jax.random.normal(k_x, (B, in_dim), jnp.float32)

    module = BentoLossPallas(in_dim, out_dim, reduction="mean", key=k_p)
    y, loss = module.apply_head(x, tile_m=8)
    jax.block_until_ready(y)
    jax.block_until_ready(loss)

    # Pure-JAX reference of the same bf16-input / f32-accumulate computation.
    xb = x.astype(jnp.bfloat16).astype(jnp.float32)
    wb = module.w_t.astype(jnp.bfloat16).astype(jnp.float32)
    y_ref = xb @ wb + module.b
    loss_ref = jnp.mean(y_ref)
    assert y.shape == (B, out_dim)
    assert jnp.allclose(y, y_ref, atol=1e-3, rtol=1e-3)
    assert jnp.allclose(loss, loss_ref, atol=1e-3, rtol=1e-3)

    # reduction='none' path (no scalar output).
    module_none = BentoLossPallas(in_dim, out_dim, reduction="none", key=k_p)
    y2, y2_same = module_none.apply_head(x, tile_m=8)
    jax.block_until_ready(y2)
    assert jnp.allclose(y2, y_ref, atol=1e-3, rtol=1e-3)
    assert jnp.allclose(y2_same, y2)

    print("KERNEL_OK")
</pallas_src>

<mosaic_0001>
module attributes {stable_mosaic.version = 11 : i64} {
  func.func @_head_reduce_kernel(%arg0: i32, %arg1: memref<8x32xbf16, #tpu.memory_space<vmem>>, %arg2: memref<32x128xbf16, #tpu.memory_space<vmem>>, %arg3: memref<1x128xf32, #tpu.memory_space<vmem>>, %arg4: memref<8x128xf32, #tpu.memory_space<vmem>>, %arg5: memref<1x1xf32, #tpu.memory_space<smem>>) attributes {dimension_semantics = [#tpu.dimension_semantics<arbitrary>], iteration_bounds = array<i64: 3>, scalar_prefetch = 0 : i64, scratch_operands = 0 : i64, tpu.core_type = #tpu.core_type<tc>, window_params = [{transform_indices = @transform_0, window_bounds = array<i64: 8, 32>}, {pipeline_mode = #tpu.pipeline_mode<synchronous>, transform_indices = @transform_1, window_bounds = array<i64: 32, 128>}, {pipeline_mode = #tpu.pipeline_mode<synchronous>, transform_indices = @transform_2, window_bounds = array<i64: 1, 128>}, {transform_indices = @transform_3, window_bounds = array<i64: 8, 128>}, {transform_indices = @transform_4, window_bounds = array<i64: 1, 1>}]} {
    %c0 = arith.constant 0 : index
    %c0_0 = arith.constant 0 : index
    %0 = vector.load %arg1[%c0, %c0_0] : memref<8x32xbf16, #tpu.memory_space<vmem>>, vector<8x32xbf16>
    %c0_1 = arith.constant 0 : index
    %c0_2 = arith.constant 0 : index
    %1 = vector.load %arg2[%c0_1, %c0_2] : memref<32x128xbf16, #tpu.memory_space<vmem>>, vector<32x128xbf16>
    %cst = arith.constant dense<0.000000e+00> : vector<8x128xf32>
    %2 = tpu.matmul %0, %1, %cst {dimension_numbers = #tpu.dot_dimension_numbers<[1], [0], [0], [1], [0, 0, 1, 1], [], []>} : vector<8x32xbf16>, vector<32x128xbf16>, vector<8x128xf32> -> vector<8x128xf32>
    %c0_3 = arith.constant 0 : index
    %c0_4 = arith.constant 0 : index
    %3 = vector.load %arg3[%c0_3, %c0_4] : memref<1x128xf32, #tpu.memory_space<vmem>>, vector<1x128xf32>
    %4 = vector.broadcast %3 : vector<1x128xf32> to vector<8x128xf32>
    %5 = arith.addf %2, %4 : vector<8x128xf32>
    %c0_5 = arith.constant 0 : index
    %c0_6 = arith.constant 0 : index
    %6 = vector.load %arg4[%c0_5, %c0_6] : memref<8x128xf32, #tpu.memory_space<vmem>>, vector<8x128xf32>
    tpu.vector_store %arg4[%c0_5, %c0_6], %5 {strides = array<i32>} : memref<8x128xf32, #tpu.memory_space<vmem>>, vector<8x128xf32>,
    %c8_i32 = arith.constant 8 : i32
    %7 = arith.muli %arg0, %c8_i32 : i32
    %8 = tpu.iota {dimensions = array<i32: 0>} : vector<8x128xi32>
    %9 = vector.broadcast %7 : i32 to vector<8x128xi32>
    %10 = arith.addi %9, %8 : vector<8x128xi32>
    %c20_i32 = arith.constant 20 : i32
    %11 = vector.broadcast %c20_i32 : i32 to vector<8x128xi32>
    %12 = arith.cmpi slt, %10, %11 : vector<8x128xi32>
    %cst_7 = arith.constant 0.000000e+00 : f32
    %13 = vector.broadcast %cst_7 : f32 to vector<8x128xf32>
    %14 = arith.select %12, %5, %13 : vector<8x128xi1>, vector<8x128xf32>
    %15 = vector.shape_cast %14 : vector<8x128xf32> to vector<1x8x128xf32>
    %cst_8 = arith.constant dense<0.000000e+00> : vector<1xf32>
    %16 = vector.multi_reduction <add>, %15, %cst_8 [1, 2] : vector<1x8x128xf32> to vector<1xf32>
    %17 = vector.shape_cast %16 : vector<1xf32> to vector<1x1x1xf32>
    %18 = vector.extract %17[0, 0, 0] : f32 from vector<1x1x1xf32>
    %c0_i32 = arith.constant 0 : i32
    %19 = arith.cmpi eq, %arg0, %c0_i32 : i32
    %20 = arith.extui %19 : i1 to i32
    %c0_i32_9 = arith.constant 0 : i32
    %21 = arith.cmpi ne, %20, %c0_i32_9 : i32
    scf.if %21 {
      %cst_15 = arith.constant 0.000000e+00 : f32
      %c0_16 = arith.constant 0 : index
      %c0_17 = arith.constant 0 : index
      %28 = memref.load %arg5[%c0_16, %c0_17] : memref<1x1xf32, #tpu.memory_space<smem>>
      memref.store %cst_15, %arg5[%c0_16, %c0_17] : memref<1x1xf32, #tpu.memory_space<smem>>
    } else {
    }
    %c0_10 = arith.constant 0 : index
    %c0_11 = arith.constant 0 : index
    %22 = memref.load %arg5[%c0_10, %c0_11] : memref<1x1xf32, #tpu.memory_space<smem>>
    %23 = arith.addf %22, %18 : f32
    %c0_12 = arith.constant 0 : index
    %c0_13 = arith.constant 0 : index
    %24 = memref.load %arg5[%c0_12, %c0_13] : memref<1x1xf32, #tpu.memory_space<smem>>
    memref.store %23, %arg5[%c0_12, %c0_13] : memref<1x1xf32, #tpu.memory_space<smem>>
    %c2_i32 = arith.constant 2 : i32
    %25 = arith.cmpi eq, %arg0, %c2_i32 : i32
    %26 = arith.extui %25 : i1 to i32
    %c0_i32_14 = arith.constant 0 : i32
    %27 = arith.cmpi ne, %26, %c0_i32_14 : i32
    scf.if %27 {
      %c0_15 = arith.constant 0 : index
      %c0_16 = arith.constant 0 : index
      %28 = memref.load %arg5[%c0_15, %c0_16] : memref<1x1xf32, #tpu.memory_space<smem>>
      %cst_17 = arith.constant 3.125000e-03 : f32
      %29 = arith.mulf %28, %cst_17 : f32
      %c0_18 = arith.constant 0 : index
      %c0_19 = arith.constant 0 : index
      %30 = memref.load %arg5[%c0_18, %c0_19] : memref<1x1xf32, #tpu.memory_space<smem>>
      memref.store %29, %arg5[%c0_18, %c0_19] : memref<1x1xf32, #tpu.memory_space<smem>>
    } else {
    }
    return
  }
  func.func @transform_0(%arg0: i32) -> (i32, i32) {
    %c0_i32 = arith.constant 0 : i32
    %c0_i32_0 = arith.constant 0 : i32
    return %arg0, %c0_i32 : i32, i32
  }
  func.func @transform_1(%arg0: i32) -> (i32, i32) {
    %c0_i32 = arith.constant 0 : i32
    %c0_i32_0 = arith.constant 0 : i32
    %c0_i32_1 = arith.constant 0 : i32
    return %c0_i32, %c0_i32_0 : i32, i32
  }
  func.func @transform_2(%arg0: i32) -> (i32, i32) {
    %c0_i32 = arith.constant 0 : i32
    %c0_i32_0 = arith.constant 0 : i32
    %c0_i32_1 = arith.constant 0 : i32
    return %c0_i32, %c0_i32_0 : i32, i32
  }
  func.func @transform_3(%arg0: i32) -> (i32, i32) {
    %c0_i32 = arith.constant 0 : i32
    %c0_i32_0 = arith.constant 0 : i32
    return %arg0, %c0_i32 : i32, i32
  }
  func.func @transform_4(%arg0: i32) -> (i32, i32) {
    %c0_i32 = arith.constant 0 : i32
    %c0_i32_0 = arith.constant 0 : i32
    %c0_i32_1 = arith.constant 0 : i32
    return %c0_i32, %c0_i32_0 : i32, i32
  }
}

</mosaic_0001>

<llo_original>
// kernel: tpu_custom_call.1
$region0: #{tpu_custom_call.1}
  #allocation0 [shape = 'u32[]', space=smem, size = 0x4, offset = 0x4, fixed_abs, tag = 'smem constant byte address 0x4 - core index']
  #allocation1 [shape = 'u32[144,128]{1,0:T(1,128)}', space=vmem, size = 0x12000, scoped, tag = 'internal scratch']
  %s0 = inlined_call_operand.hbm [shape: bf16[24,32], index: 0, kind: input, shape index: {}]
  %s1 = inlined_call_operand.hbm [shape: bf16[32,128], index: 1, kind: input, shape index: {}]
  %s2 = inlined_call_operand.vmem [shape: f32[1,128], index: 2, kind: input, shape index: {}]
  %s3 = inlined_call_operand.hbm [shape: f32[24,128], index: 3, kind: output, shape index: {0}]
  %s4 = inlined_call_operand.hbm [shape: f32[1,1], index: 4, kind: output, shape index: {1}]
  %5 = xla_tuple %s3, %s4
  %s6 = sld [smem:[#allocation0]]
  $region69: #{tpu_custom_call.1} parent=0
    _
  %s8 = ssub.s32 1, %s6
  %s9 = scalar_select 0, %s8, %s6
  $region1: #{tpu_custom_call.1} parent=0
    #allocation2 [shape = 'u8[4096]{0}', space=vmem, size = 0x1000, scoped, tag = 'input window, operand 0']
    #allocation3 [shape = 's32[2]{0}', space=sflag, size = 0x8, scoped, tag = 'scoped memory for tpu_custom_call.1']
    #allocation4 [shape = 's32[2]{0}', space=sflag, size = 0x8, scoped, tag = 'scoped memory for tpu_custom_call.1']
    #allocation5 [shape = 's32[2]{0}', space=sflag, size = 0x8, scoped, tag = 'scoped memory for tpu_custom_call.1']
    #allocation6 [shape = 'u8[8192]{0}', space=vmem, size = 0x2000, scoped, tag = 'input window, operand 1, single buffered']
    #allocation7 [shape = 's32[1]{0}', space=sflag, size = 0x4, scoped, tag = 'scoped memory for tpu_custom_call.1']
    #allocation8 [shape = 'u8[8192]{0}', space=vmem, size = 0x2000, scoped, tag = 'output window, operand 0']
    #allocation9 [shape = 'u8[512]{0}', space=smem, size = 0x200, scoped, tag = 'output window, operand 1, single buffered']
    %10 = vsyncpa [#allocation3], 0
    %s11 = scalar_lea.sflag [#allocation3], 1
    %12 = vsyncpa %s11, 0
    %13 = vsyncpa [#allocation7], 0
    %14 = vsyncpa [#allocation4], 0
    %s15 = scalar_lea.sflag [#allocation4], 1
    %16 = vsyncpa %s15, 0
    %17 = vsyncpa [#allocation5], 0
    loop: start=0, step=1, limit=5
    $region2: #{tpu_custom_call.1} parent=1 // loop_pre_header
      _
    $region3: #{tpu_custom_call.1} parent=1 // loop_header
      %s19 = sphi 0, %s23
      %p20 = scmp.ge.s32.totalorder %s19, 5
      %s29 = sphi 0, %s31
      %s32 = sphi 0, %s29
      %s33 = sphi 0, %s32
      %s49 = sphi 0, %s33
      %s53 = sphi 0, %s53
      %s55 = sphi 0, %s53
      %s56 = sphi 0, %s55
      %s70 = sphi 0, %s56
      %s74 = sphi 0, %s74
      %s76 = sphi 0, %s74
      %s77 = sphi 0, %s76
      %s91 = sphi 0, %s77
      %s97 = sphi 0, %s99
      %s100 = sphi 0, %s97
      %s101 = sphi 0, %s100
      %s117 = sphi 0, %s101
      %s121 = sphi 0, %s121
      %s123 = sphi 0, %s121
      %s124 = sphi 0, %s123
      %s138 = sphi 0, %s124
    $region4: #{tpu_custom_call.1} parent=1 // loop_header_branch
      %22 = sbr.rel (%p20) target = $region8
    $region5: #{tpu_custom_call.1} parent=1 // loop_body
      %s24 = ssub.s32 %s19, 1
      %s25 = ssub.s32 %s19, 2
      %s26 = sadd.s32 %s19, 1
      %s27 = ssub.s32 %s19, %s26
      %p28 = scmp.eq.s32.totalorder %s27, 0
      %s30 = sadd.s32 %s29, 1
      %s31 = scalar_select %p28, %s29, %s30
      %p34 = pneg %p28
      %p35 = scmp.eq.s32.totalorder %s19, 2
      %p36 = por %p34, %p35
      %p37 = scmp.ne.s32.totalorder %s29, %s32
      %p38 = scmp.eq.s32.totalorder %s19, 0
      %p39 = por %p37, %p38
      %p40 = scmp.ne.s32.totalorder %s29, %s32
      %p41 = scmp.eq.s32.totalorder %s24, 2
      %p42 = por %p40, %p41
      %p43 = scmp.ne.s32.totalorder %s32, %s33
      %p44 = scmp.eq.s32.totalorder %s24, 0
      %p45 = por %p43, %p44
      %p46 = scmp.ne.s32.totalorder %s32, %s33
      %p47 = scmp.eq.s32.totalorder %s25, 2
      %p48 = por %p46, %p47
      %p50 = scmp.ne.s32.totalorder %s33, %s49
      %p51 = scmp.eq.s32.totalorder %s25, 0
      %p52 = por %p50, %p51
      %s54 = sadd.s32 %s53, 1
      %p57 = scmp.eq.s32.totalorder %s19, 2
      %p58 = scmp.ne.s32.totalorder %s53, %s55
      %p59 = scmp.eq.s32.totalorder %s19, 0
      %p60 = por %p58, %p59
      %p61 = scmp.ne.s32.totalorder %s53, %s55
      %p62 = scmp.eq.s32.totalorder %s24, 2
      %p63 = por %p61, %p62
      %p64 = scmp.ne.s32.totalorder %s55, %s56
      %p65 = scmp.eq.s32.totalorder %s24, 0
      %p66 = por %p64, %p65
      %p67 = scmp.ne.s32.totalorder %s55, %s56
      %p68 = scmp.eq.s32.totalorder %s25, 2
      %p69 = por %p67, %p68
      %p71 = scmp.ne.s32.totalorder %s56, %s70
      %p72 = scmp.eq.s32.totalorder %s25, 0
      %p73 = por %p71, %p72
      %s75 = sadd.s32 %s74, 1
      %p78 = scmp.eq.s32.totalorder %s19, 2
      %p79 = scmp.ne.s32.totalorder %s74, %s76
      %p80 = scmp.eq.s32.totalorder %s19, 0
      %p81 = por %p79, %p80
      %p82 = scmp.ne.s32.totalorder %s74, %s76
      %p83 = scmp.eq.s32.totalorder %s24, 2
      %p84 = por %p82, %p83
      %p85 = scmp.ne.s32.totalorder %s76, %s77
      %p86 = scmp.eq.s32.totalorder %s24, 0
      %p87 = por %p85, %p86
      %p88 = scmp.ne.s32.totalorder %s76, %s77
      %p89 = scmp.eq.s32.totalorder %s25, 2
      %p90 = por %p88, %p89
      %p92 = scmp.ne.s32.totalorder %s77, %s91
      %p93 = scmp.eq.s32.totalorder %s25, 0
      %p94 = por %p92, %p93
      %s95 = ssub.s32 %s19, %s26
      %p96 = scmp.eq.s32.totalorder %s95, 0
      %s98 = sadd.s32 %s97, 1
      %s99 = scalar_select %p96, %s97, %s98
      %p102 = pneg %p96
      %p103 = scmp.eq.s32.totalorder %s19, 2
      %p104 = por %p102, %p103
      %p105 = scmp.ne.s32.totalorder %s97, %s100
      %p106 = scmp.eq.s32.totalorder %s19, 0
      %p107 = por %p105, %p106
      %p108 = scmp.ne.s32.totalorder %s97, %s100
      %p109 = scmp.eq.s32.totalorder %s24, 2
      %p110 = por %p108, %p109
      %p111 = scmp.ne.s32.totalorder %s100, %s101
      %p112 = scmp.eq.s32.totalorder %s24, 0
      %p113 = por %p111, %p112
      %p114 = scmp.ne.s32.totalorder %s100, %s101
      %p115 = scmp.eq.s32.totalorder %s25, 2
      %p116 = por %p114, %p115
      %p118 = scmp.ne.s32.totalorder %s101, %s117
      %p119 = scmp.eq.s32.totalorder %s25, 0
      %p120 = por %p118, %p119
      %s122 = sadd.s32 %s121, 1
      %p125 = scmp.eq.s32.totalorder %s19, 2
      %p126 = scmp.ne.s32.totalorder %s121, %s123
      %p127 = scmp.eq.s32.totalorder %s19, 0
      %p128 = por %p126, %p127
      %p129 = scmp.ne.s32.totalorder %s121, %s123
      %p130 = scmp.eq.s32.totalorder %s24, 2
      %p131 = por %p129, %p130
      %p132 = scmp.ne.s32.totalorder %s123, %s124
      %p133 = scmp.eq.s32.totalorder %s24, 0
      %p134 = por %p132, %p133
      %p135 = scmp.ne.s32.totalorder %s123, %s124
      %p136 = scmp.eq.s32.totalorder %s25, 2
      %p137 = por %p135, %p136
      %p139 = scmp.ne.s32.totalorder %s124, %s138
      %p140 = scmp.eq.s32.totalorder %s25, 0
      %p141 = por %p139, %p140
      %p142 = scmp.le.s32.totalorder 1, %s19
      %p143 = scmp.lt.s32.totalorder %s19, 4
      %p144 = pnand %p142, %p143
      %p145 = pneg %p144
      // Predicated region
      $region9: #{tpu_custom_call.1} parent=5 // pred_check
        _
      $region10: #{tpu_custom_call.1} parent=5 // pred_check_branch
        %147 = sbr.rel (%p144) target = $region12
      $region11: #{tpu_custom_call.1} parent=5 // pred_region
        %s148 = ssub.s32 %s19, 1
        // Predicated region
        $region13: #{tpu_custom_call.1} parent=11 // pred_check
          %p149 = pneg %p66
        $region14: #{tpu_custom_call.1} parent=11 // pred_check_branch
          %151 = sbr.rel (%p149) target = $region16
        $region15: #{tpu_custom_call.1} parent=11 // pred_region
          %s153 = ssub.s32 256, 256
          %154 = vsyncadd [#allocation7], %s153
          %s155 = sshll.u32 [#allocation6], 4
          %s156 = int_to_ptr.vmem [resolvable:$true] %s155
          %161 = dma.hbm_to_vmem [thread:$0]  %s1, 256, %s156, [#allocation7], 64, 64, 4
        $region16: #{tpu_custom_call.1} parent=11 // pred_fallthru
          _
        // Predicated region
        $region17: #{tpu_custom_call.1} parent=11 // pred_check
          %p162 = pneg %p87
        $region18: #{tpu_custom_call.1} parent=11 // pred_check_branch
          %164 = sbr.rel (%p162) target = $region20
        $region19: #{tpu_custom_call.1} parent=11 // pred_region
          _
        $region20: #{tpu_custom_call.1} parent=11 // pred_fallthru
          _
      $region12: #{tpu_custom_call.1} parent=5 // pred_fallthru
        _
      %p165 = scmp.lt.s32.totalorder %s19, 3
      // Predicated region
      $region21: #{tpu_custom_call.1} parent=5 // pred_check
        %p166 = pneg %p165
      $region22: #{tpu_custom_call.1} parent=5 // pred_check_branch
        %168 = sbr.rel (%p166) target = $region24
      $region23: #{tpu_custom_call.1} parent=5 // pred_region
        // Predicated region
        $region25: #{tpu_custom_call.1} parent=23 // pred_check
          %p169 = pneg %p39
        $region26: #{tpu_custom_call.1} parent=23 // pred_check_branch
          %171 = sbr.rel (%p169) target = $region28
        $region27: #{tpu_custom_call.1} parent=23 // pred_region
          %s172 = sand.u32 %s29, 1
          %s173 = scalar_lea.sflag [#allocation3], %s172
          %s174 = sand.u32 %s29, 1
          %s175 = smul.addr %s174, 4
          %s176 = scalar_lea.vmem [#allocation2], %s175
          %s178 = ssub.s32 64, 64
          %179 = vsyncadd %s173, %s178
          %s180 = smul.addr %s19, 64
          %s181 = scalar_lea.hbm %s0, %s180
          %s183 = sshll.u32 %s176, 4
          %s184 = int_to_ptr.vmem [resolvable:$true] %s183
          %186 = dma.hbm_to_vmem [thread:$0]  %s181, 64, %s184, %s173
        $region28: #{tpu_custom_call.1} parent=23 // pred_fallthru
          _
      $region24: #{tpu_custom_call.1} parent=5 // pred_fallthru
        _
      %p187 = scmp.le.s32.totalorder 1, %s19
      %p188 = scmp.lt.s32.totalorder %s19, 4
      %p189 = pnand %p187, %p188
      %p190 = pneg %p189
      // Predicated region
      $region29: #{tpu_custom_call.1} parent=5 // pred_check
        _
      $region30: #{tpu_custom_call.1} parent=5 // pred_check_branch
        %192 = sbr.rel (%p189) target = $region32
      $region31: #{tpu_custom_call.1} parent=5 // pred_region
        %s193 = ssub.s32 %s19, 1
        %s194 = sand.u32 %s32, 1
        %s195 = scalar_lea.sflag [#allocation3], %s194
        %s196 = sand.u32 %s32, 1
        %s197 = smul.addr %s196, 4
        %s198 = scalar_lea.vmem [#allocation2], %s197
        // Predicated region
        $region33: #{tpu_custom_call.1} parent=31 // pred_check
          %p199 = pneg %p45
        $region34: #{tpu_custom_call.1} parent=31 // pred_check_branch
          %201 = sbr.rel (%p199) target = $region36
        $region35: #{tpu_custom_call.1} parent=31 // pred_region
          %202 = dma.done %s195, 64
        $region36: #{tpu_custom_call.1} parent=31 // pred_fallthru
          _
        // Predicated region
        $region37: #{tpu_custom_call.1} parent=31 // pred_check
          %p203 = pneg %p66
        $region38: #{tpu_custom_call.1} parent=31 // pred_check_branch
          %205 = sbr.rel (%p203) target = $region40
        $region39: #{tpu_custom_call.1} parent=31 // pred_region
          %206 = dma.done [#allocation7], 256
        $region40: #{tpu_custom_call.1} parent=31 // pred_fallthru
          _
        %s207 = sand.u32 %s32, 1
        %s208 = scalar_lea.sflag [#allocation3], %s207
        %s209 = sand.u32 %s32, 1
        %s210 = smul.addr %s209, 4
        %s211 = scalar_lea.vmem [#allocation2], %s210
        %p212 = pneg %p45
        %p213 = pneg %p42
        %p214 = pneg %p66
        %p215 = pneg %p63
        %p216 = pneg %p87
        %p217 = pneg %p84
        %p218 = pneg %p113
        %p219 = pneg %p110
        %s220 = sand.u32 %s100, 1
        %s221 = scalar_lea.sflag [#allocation4], %s220
        %s222 = sand.u32 %s100, 1
        %s223 = smul.addr %s222, 8
        %s224 = scalar_lea.vmem [#allocation8], %s223
        %p225 = pneg %p134
        %p226 = pneg %p131
        %v228 = vld [vmem:[%s198] sm:$0xf]
        %v229 = vld [vmem:[#allocation6] sm:$0xf]
        %v230 = vld [vmem:[#allocation6 + $0x4] sm:$0xf]
        %v231 = vld [vmem:[#allocation6 + $0x8] sm:$0xf]
        %v232 = vld [vmem:[#allocation6 + $0xc] sm:$0xf]
        %v233 = vld [vmem:[%s2] sm:$0x1]
        %v235 = vlaneseq
        %v236 = vshrl.u32 %v235, 7
        %v237 = vsub.s32 0, %v236
        %v238 = vrot.slane %v233, %v237
        %v244 = vunpack.c.l.b16 %v229
        %v245 = vunpack.c.l.b16 %v230
        %v246 = vunpack.c.l.b16 %v231
        %v247 = vunpack.c.l.b16 %v232
        %v248 = vpack.c.b16 %v245, %v244
        %v249 = vpack.c.b16 %v247, %v246
        %vm252 = vcmask 261120
        %v254 = vsel %vm252, %v228, 0
        %256 = vmatprep.subr.bf16.mxu0 0
        %257 = vmatpush1.bf16.msra.mxu0 0
        %258 = vmatprep.subr.bf16.mxu0 0
        %259 = vmatpush1.bf16.msra.mxu0 0
        %260 = vmatprep.subr.bf16.mxu0 0
        %261 = vmatpush1.bf16.msra.mxu0 0
        %262 = vmatprep.subr.bf16.mxu0 0
        %263 = vmatpush1.bf16.msra.mxu0 0
        %264 = vmatprep.subr.bf16.mxu0 0
        %265 = vmatpush1.bf16.msra.mxu0 0
        %266 = vmatprep.subr.bf16.mxu0 0
        %267 = vmatpush1.bf16.msra.mxu0 0
        %268 = vmatprep.subr.bf16.mxu0 0
        %269 = vmatpush1.bf16.msra.mxu0 %v249
        %270 = vmatprep.subr.bf16.mxu0 0
        %271 = vmatpush1.bf16.msra.mxu0 %v248
        %272 = vmatprep.subr.bf16.mxu0 0
        %273 = vmatpush2.bf16.msra.mxu0 0
        %274 = vmatprep.subr.bf16.mxu0 0
        %275 = vmatpush2.bf16.msra.mxu0 0
        %276 = vmatprep.subr.bf16.mxu0 0
        %277 = vmatpush2.bf16.msra.mxu0 0
        %278 = vmatprep.subr.bf16.mxu0 0
        %279 = vmatpush2.bf16.msra.mxu0 0
        %280 = vmatprep.subr.bf16.mxu0 0
        %281 = vmatpush2.bf16.msra.mxu0 0
        %282 = vmatprep.subr.bf16.mxu0 0
        %283 = vmatpush2.bf16.msra.mxu0 0
        %284 = vmatprep.subr.bf16.mxu0 0
        %285 = vmatpush2.bf16.msra.mxu0 0
        %286 = vmatprep.subr.bf16.mxu0 0
        %287 = vmatpush2.bf16.msra.mxu0 0
        %288 = vmatprep.mubr.bf16.mxu0 0
        %289 = vmatmul.mubr.bf16.gmra.mxu0 %v254
        %v290 = vpop.f32.mrf.mxu0
        %v291 = vadd.f32 %v238, %v290
        %v292 = vpop.f32.mrf.mxu0
        %v293 = vpop.f32.mrf.mxu0
        %v294 = vpop.f32.mrf.mxu0
        %295 = vdwg.mxu0
        %296 = vst [vmem:[%s224] sm:$0xff] %v291
        %s297 = smul.u32 %s24, 8
        %v298 = vlaneseq
        %v299 = vshrl.u32 %v298, 7
        %v300 = vstv %s297
        %v301 = vadd.s32 %v300, %v299
        %vm302 = vcmp.lt.s32.totalorder %v301, 20
        %v303 = vsel %vm302, %v291, 0.0
        %304 = vadd.xlane.f32.xlu0 %v303
        %v305 = vpop.xlane.xlu0 %304
        %v306 = vrot.slane %v305, 4
        %v307 = vadd.f32 %v305, %v306
        %v308 = vrot.slane %v307, 2
        %v309 = vadd.f32 %v307, %v308
        %v310 = vrot.slane %v309, 1
        %v311 = vadd.f32 %v309, %v310
        %s312 = vtos %v311
        %p313 = scmp.eq.s32.totalorder %s24, 0
        // Predicated region
        $region41: #{tpu_custom_call.1} parent=31 // pred_check
          %p314 = pneg %p313
        $region42: #{tpu_custom_call.1} parent=31 // pred_check_branch
          %316 = sbr.rel (%p314) target = $region44
        $region43: #{tpu_custom_call.1} parent=31 // pred_region
          %s317 = scalar_lea.smem [#allocation9], 0
          %318 = sst [smem:[%s317]] 0.0
        $region44: #{tpu_custom_call.1} parent=31 // pred_fallthru
          _
        %s319 = sld [smem:[#allocation9]]
        %s320 = sadd.f32 %s319, %s312
        %s321 = scalar_lea.smem [#allocation9], 0
        %322 = sst [smem:[%s321]] %s320
        %p323 = scmp.eq.s32.totalorder %s24, 2
        // Predicated region
        $region45: #{tpu_custom_call.1} parent=31 // pred_check
          %p324 = pneg %p323
        $region46: #{tpu_custom_call.1} parent=31 // pred_check_branch
          %326 = sbr.rel (%p324) target = $region48
        $region47: #{tpu_custom_call.1} parent=31 // pred_region
          %s327 = sld [smem:[#allocation9]]
          %s328 = smul.f32 %s327, 0.003125
          %329 = sst [smem:[%s321]] %s328
        $region48: #{tpu_custom_call.1} parent=31 // pred_fallthru
          _
        %s330 = sand.u32 %s100, 1
        %s331 = scalar_lea.sflag [#allocation4], %s330
        %s332 = sand.u32 %s100, 1
        %s333 = smul.addr %s332, 8
        %s334 = scalar_lea.vmem [#allocation8], %s333
        // Predicated region
        $region49: #{tpu_custom_call.1} parent=31 // pred_check
          %p335 = pneg %p110
        $region50: #{tpu_custom_call.1} parent=31 // pred_check_branch
          %337 = sbr.rel (%p335) target = $region52
        $region51: #{tpu_custom_call.1} parent=31 // pred_region
          %s339 = ssub.s32 128, 128
          %340 = vsyncadd %s331, %s339
          %s341 = smul.addr %s24, 128
          %s342 = scalar_lea.hbm %s3, %s341
          %s344 = sshll.u32 %s334, 4
          %s345 = int_to_ptr.vmem [resolvable:$true] %s344
          %347 = dma.vmem_to_hbm [thread:$0]  %s345, 128, %s342, %s331
        $region52: #{tpu_custom_call.1} parent=31 // pred_fallthru
          _
        // Predicated region
        $region53: #{tpu_custom_call.1} parent=31 // pred_check
          %p348 = pneg %p131
        $region54: #{tpu_custom_call.1} parent=31 // pred_check_branch
          %350 = sbr.rel (%p348) target = $region56
        $region55: #{tpu_custom_call.1} parent=31 // pred_region
          %s352 = ssub.s32 16, 16
          %353 = vsyncadd [#allocation5], %s352
          %356 = dma.smem_to_hbm [#allocation9], 16, %s4, [#allocation5]
        $region56: #{tpu_custom_call.1} parent=31 // pred_fallthru
          _
        // Predicated region
        $region57: #{tpu_custom_call.1} parent=31 // pred_check
          %p357 = pneg %p131
        $region58: #{tpu_custom_call.1} parent=31 // pred_check_branch
          %359 = sbr.rel (%p357) target = $region60
        $region59: #{tpu_custom_call.1} parent=31 // pred_region
          %360 = dma.done [#allocation5], 16
        $region60: #{tpu_custom_call.1} parent=31 // pred_fallthru
          _
        %361 = sfence
      $region32: #{tpu_custom_call.1} parent=5 // pred_fallthru
        _
      %p362 = scmp.le.s32.totalorder 2, %s19
      // Predicated region
      $region61: #{tpu_custom_call.1} parent=5 // pred_check
        %p363 = pneg %p362
      $region62: #{tpu_custom_call.1} parent=5 // pred_check_branch
        %365 = sbr.rel (%p363) target = $region64
      $region63: #{tpu_custom_call.1} parent=5 // pred_region
        %s366 = ssub.s32 %s19, 2
        // Predicated region
        $region65: #{tpu_custom_call.1} parent=63 // pred_check
          %p367 = pneg %p116
        $region66: #{tpu_custom_call.1} parent=63 // pred_check_branch
          %369 = sbr.rel (%p367) target = $region68
        $region67: #{tpu_custom_call.1} parent=63 // pred_region
          %s370 = sand.u32 %s101, 1
          %s371 = scalar_lea.sflag [#allocation4], %s370
          %s372 = sand.u32 %s101, 1
          %s373 = smul.addr %s372, 8
          %s374 = scalar_lea.vmem [#allocation8], %s373
          %375 = dma.done %s371, 128
        $region68: #{tpu_custom_call.1} parent=63 // pred_fallthru
          _
      $region64: #{tpu_custom_call.1} parent=5 // pred_fallthru
        _
    $region6: #{tpu_custom_call.1} parent=1 // loop_footer
      %s23 = sadd.s32 1, %s19
    $region7: #{tpu_custom_call.1} parent=1 // loop_footer_branch
      %18 = sbr.rel target = $region3
    $region8: #{tpu_custom_call.1} parent=1 // loop_exit
      _
    %376 = vsyncpa [#allocation3], 1
    %s377 = scalar_lea.sflag [#allocation3], 1
    %378 = vsyncpa %s377, 1
    %379 = vsyncpa [#allocation7], 1
    %380 = vsyncpa [#allocation4], 1
    %s381 = scalar_lea.sflag [#allocation4], 1
    %382 = vsyncpa %s381, 1
    %383 = vsyncpa [#allocation5], 1
    %s384 = scalar_lea.sflag [#allocation5], 1
    %385 = vsyncpa %s384, 1

</llo_original>
